<compile_context>
chip_gen: v6e
topology: v6e:2x2x1
jax: 0.10.0
libtpu: 0.0.40
codegen_flags: <defaults>
</compile_context>

<pallas_src>
import functools

import jax
import jax.numpy as jnp
from jax.experimental import pallas as pl
from jax.experimental.pallas import tpu as pltpu


def _focal_loss_kernel(logits_ref, targets_ref, *rest, gamma, alpha_scalar,
                       has_alpha_vec, n_rows, tile_n, tiles_per_core,
                       reduction):
    if has_alpha_vec:
        alpha_ref, out_ref = rest
    else:
        (out_ref,) = rest

    logits = logits_ref[...].astype(jnp.float32)          # (tile_n, C) f32
    tgt = targets_ref[...]                                 # (tile_n, 1) int32
    tn, c = logits.shape

    # one-hot(targets) via an iota over the class (lane) axis — expresses
    # torch.gather(_, 1, targets) on the VPU.
    class_ids = jax.lax.broadcasted_iota(jnp.int32, (tn, c), 1)
    one_hot = class_ids == tgt                             # bool (tile_n, C)

    # Numerically stable cross-entropy without materializing log_probs/probs:
    #   ce  = log(sum(exp(x - m))) - (x_t - m)
    #   p_t = exp(-ce)   (== softmax(x)[target])
    m = jnp.max(logits, axis=1, keepdims=True)             # (tile_n, 1)
    shifted = logits - m

    # One-hot gathers BEFORE the bulk exp (review: `one_hot` dies here, so it
    # is not live across the big exp / sumexp — lower peak vreg/VMEM pressure).
    shifted_t = jnp.sum(jnp.where(one_hot, shifted, 0.0),
                        axis=1, keepdims=True)             # (tile_n, 1)
    if has_alpha_vec:
        alpha_t = jnp.sum(jnp.where(one_hot, alpha_ref[...], 0.0),
                          axis=1, keepdims=True)           # (tile_n, 1)

    sumexp = jnp.sum(jnp.exp(shifted), axis=1, keepdims=True)
    ce = jnp.log(sumexp) - shifted_t                       # (tile_n, 1)
    p_t = jnp.exp(-ce)                                     # (tile_n, 1)

    # focal modulating factor (1 - p_t) ** gamma.
    # Clamp: p_t can exceed 1.0 by a ULP (ce rounding slightly negative); a
    # negative base would NaN on the pow path.
    base = jnp.maximum(1.0 - p_t, 0.0)
    g = float(gamma)
    if g == int(g) and 0 <= int(g) <= 8:
        ig = int(g)                                        # VPU multiplies
        w = jnp.ones_like(base) if ig == 0 else base
        for _ in range(max(ig - 1, 0)):
            w = w * base
    else:
        w = base ** g                                      # EUP pow path

    if has_alpha_vec:
        w = w * alpha_t
    elif alpha_scalar != 1.0:
        w = w * alpha_scalar

    focal = w * ce                                         # (tile_n, 1)

    if reduction in ("mean", "sum"):
        core = pl.program_id(0)                            # "parallel" axis
        step = pl.program_id(1)                            # "arbitrary" axis
        tile_idx = core * tiles_per_core + step            # *unclamped* index

        # Mask rows past N: covers the ragged last tile and the (clamped)
        # duplicate tail step of the second core.  jnp.where selects, so any
        # inf/NaN from stale padded input rows cannot leak into the sum.
        row_ids = jax.lax.broadcasted_iota(jnp.int32, (tn, 1), 0)
        valid = (tile_idx * tile_n + row_ids) < n_rows
        focal = jnp.where(valid, focal, 0.0)

        partial = jnp.sum(focal, axis=0, keepdims=True)    # (1, 1)

        @pl.when(step == 0)
        def _init():
            out_ref[...] = jnp.zeros_like(out_ref)

        out_ref[...] += partial                            # per-core partial
    else:  # 'none' — lane-dense (1, tile_n) store (no masked single-lane vst)
        out_ref[...] = focal.reshape(1, tn).astype(out_ref.dtype)


def _tile_plan(n, c, itemsize):
    """Pick the row tile and a right-sized VMEM limit.

    Per-row VMEM cost model (bytes), including (8,128) lane padding:
      * logits input block, double-buffered:            2 * c_pad * itemsize
      * targets (tile_n,1) i32 block, double-buffered:  2 * 512
      * ~3 live f32 (tile_n, c_pad) intermediates:      3 * c_pad * 4
      * ~4 live (tile_n, 1) f32 per-row values:         4 * 512
      * 'none' output block, double-buffered:           ~64
    """
    c_pad = ((c + 127) // 128) * 128
    row_bytes = 2 * c_pad * itemsize + 2 * 512 + 3 * c_pad * 4 + 4 * 512 + 64

    budget = 18 << 20                        # VMEM usage target per step
    tile = max(int(budget // row_bytes), 8)
    if tile >= n:
        tile = n                             # single (possibly unaligned) tile
    elif tile >= 128:
        tile = (tile // 128) * 128           # lane-aligned 'none' output rows
    else:
        tile = max((tile // 8) * 8, 8)

    est = tile * row_bytes + c_pad * 4 + (1 << 20)   # + alpha + misc slack
    vmem_limit = min(max(int(est * 1.5), 8 << 20), 32 << 20)
    return tile, vmem_limit


def focal_loss(logits, targets, alpha=None, gamma=2.0, reduction="mean",
               tile_n=None):
    """Pallas TPU focal loss matching FocalLoss.forward for (N, C) logits."""
    n, c = logits.shape
    itemsize = jnp.dtype(logits.dtype).itemsize

    auto_tile, vmem_limit = _tile_plan(n, c, itemsize)
    if tile_n is None:
        tile_n = auto_tile
    else:
        tile_n = int(tile_n)
        tile_n = n if tile_n >= n else max(8, (tile_n // 8) * 8)
    num_tiles = pl.cdiv(n, tile_n)

    targets_2d = targets.astype(jnp.int32).reshape(n, 1)

    has_alpha_vec = alpha is not None and not isinstance(alpha, (int, float))
    alpha_scalar = float(alpha) if isinstance(alpha, (int, float)) else 1.0

    inputs = [logits, targets_2d]
    if has_alpha_vec:
        alpha_vec = jnp.asarray(alpha, jnp.float32).reshape(1, c)
        inputs.append(alpha_vec)

    if reduction in ("mean", "sum"):
        # Leading "parallel" axis of 2 -> both v7x TensorCores work; on 1-TC
        # chips it just serializes (costs at most one fully-masked extra step).
        num_cores = 2 if num_tiles >= 2 else 1
        tiles_per_core = pl.cdiv(num_tiles, num_cores)

        def row_map(core, i):
            t = core * tiles_per_core + i
            return (jnp.minimum(t, num_tiles - 1), 0)      # clamp tail overrun

        in_specs = [pl.BlockSpec((tile_n, c), row_map),
                    pl.BlockSpec((tile_n, 1), row_map)]
        if has_alpha_vec:
            in_specs.append(pl.BlockSpec((1, c), lambda core, i: (0, 0)))
        out_shape = jax.ShapeDtypeStruct((num_cores, 1), jnp.float32)
        out_spec = pl.BlockSpec((1, 1), lambda core, i: (core, 0))  # resident
        grid = (num_cores, tiles_per_core)
        dims = ("parallel", "arbitrary")
    else:
        tiles_per_core = num_tiles  # unused on this path
        in_specs = [pl.BlockSpec((tile_n, c), lambda i: (i, 0)),
                    pl.BlockSpec((tile_n, 1), lambda i: (i, 0))]
        if has_alpha_vec:
            in_specs.append(pl.BlockSpec((1, c), lambda i: (0, 0)))
        # Lane-dense output: (num_tiles, tile_n) rows; padded tail entries are
        # written (from per-row-isolated garbage) and sliced off in the wrapper.
        out_shape = jax.ShapeDtypeStruct((num_tiles, tile_n), jnp.float32)
        out_spec = pl.BlockSpec((1, tile_n), lambda i: (i, 0))
        grid = (num_tiles,)
        dims = ("parallel",)

    kernel = functools.partial(
        _focal_loss_kernel,
        gamma=float(gamma),
        alpha_scalar=alpha_scalar,
        has_alpha_vec=has_alpha_vec,
        n_rows=int(n),
        tile_n=int(tile_n),
        tiles_per_core=int(tiles_per_core),
        reduction=reduction,
    )

    out = pl.pallas_call(
        kernel,
        out_shape=out_shape,
        grid=grid,
        in_specs=in_specs,
        out_specs=out_spec,
        compiler_params=pltpu.CompilerParams(
            dimension_semantics=dims,
            vmem_limit_bytes=int(vmem_limit),
        ),
    )(*inputs)

    if reduction == "mean":
        return jnp.sum(out) / n
    if reduction == "sum":
        return jnp.sum(out)
    return out.reshape(-1)[:n]

# TODO(synk): for C < 128 the class axis underfills the 128-lane vregs; the
# optional row-packing (k = 128 // C rows per register) from the review is not
# implemented here — only worthwhile if profiling shows VPU/EUP saturation.


def _focal_loss_ref(logits, targets, alpha=None, gamma=2.0, reduction="mean"):
    """Pure-JAX reference mirroring the PyTorch module (for verification)."""
    logits = logits.astype(jnp.float32)
    log_probs = jax.nn.log_softmax(logits, axis=1)
    probs = jax.nn.softmax(logits, axis=1)
    ce = -jnp.take_along_axis(log_probs, targets[:, None], axis=1)[:, 0]
    p_t = jnp.take_along_axis(probs, targets[:, None], axis=1)[:, 0]
    if alpha is None:
        alpha_t = 1.0
    elif isinstance(alpha, (int, float)):
        alpha_t = alpha
    else:
        alpha_t = jnp.asarray(alpha)[targets]
    focal = alpha_t * (1.0 - p_t) ** gamma * ce
    if reduction == "mean":
        return focal.mean()
    if reduction == "sum":
        return focal.sum()
    return focal


if __name__ == "__main__":
    key = jax.random.PRNGKey(0)
    k1, k2, k3 = jax.random.split(key, 3)

    # Module defaults: alpha=None, gamma=2.0, reduction='mean'.
    N, C = 8, 32
    logits = jax.random.normal(k1, (N, C), dtype=jnp.float32)
    targets = jax.random.randint(k2, (N,), 0, C, dtype=jnp.int32)

    loss = jax.block_until_ready(focal_loss(logits, targets))
    ref = _focal_loss_ref(logits, targets)
    assert jnp.allclose(loss, ref, rtol=1e-5, atol=1e-5), (loss, ref)

    # Tiled / masked paths: grid > 1, ragged last tile, 2-way parallel split
    # with a clamped duplicate tail step, native bf16 input, per-class alpha,
    # all reductions (incl. lane-dense 'none').
    N2, C2 = 20, 128
    logits2 = jax.random.normal(k3, (N2, C2), dtype=jnp.bfloat16)
    targets2 = jax.random.randint(k2, (N2,), 0, C2, dtype=jnp.int32)
    alpha_vec = jnp.linspace(0.5, 1.5, C2, dtype=jnp.float32)

    for red in ("mean", "sum", "none"):
        out = jax.block_until_ready(
            focal_loss(logits2, targets2, alpha=alpha_vec, gamma=2.0,
                       reduction=red, tile_n=8))
        ref2 = _focal_loss_ref(logits2, targets2, alpha=alpha_vec,
                               gamma=2.0, reduction=red)
        assert jnp.allclose(out, ref2, rtol=1e-3, atol=1e-3), (red, out, ref2)

    # Scalar-alpha fast path + non-integer gamma (pow path with clamped base).
    out_s = jax.block_until_ready(
        focal_loss(logits2, targets2, alpha=0.25, gamma=1.5,
                   reduction="mean", tile_n=8))
    ref_s = _focal_loss_ref(logits2, targets2, alpha=0.25, gamma=1.5,
                            reduction="mean")
    assert jnp.allclose(out_s, ref_s, rtol=1e-3, atol=1e-3), (out_s, ref_s)

    print("KERNEL_OK")
</pallas_src>

<mosaic_0001>
module attributes {stable_mosaic.version = 11 : i64} {
  func.func @_focal_loss_kernel(%arg0: i32, %arg1: i32, %arg2: memref<8x32xf32, #tpu.memory_space<vmem>>, %arg3: memref<8x1xi32, #tpu.memory_space<vmem>>, %arg4: memref<1x1xf32, #tpu.memory_space<vmem>>) attributes {dimension_semantics = [#tpu.dimension_semantics<parallel>, #tpu.dimension_semantics<arbitrary>], iteration_bounds = array<i64: 1, 1>, scalar_prefetch = 0 : i64, scratch_operands = 0 : i64, tpu.core_type = #tpu.core_type<tc>, window_params = [{transform_indices = @transform_0, window_bounds = array<i64: 8, 32>}, {transform_indices = @transform_1, window_bounds = array<i64: 8, 1>}, {transform_indices = @transform_2, window_bounds = array<i64: 1, 1>}]} {
    %c0 = arith.constant 0 : index
    %c0_0 = arith.constant 0 : index
    %0 = vector.load %arg2[%c0, %c0_0] : memref<8x32xf32, #tpu.memory_space<vmem>>, vector<8x32xf32>
    %c0_1 = arith.constant 0 : index
    %c0_2 = arith.constant 0 : index
    %1 = vector.load %arg3[%c0_1, %c0_2] : memref<8x1xi32, #tpu.memory_space<vmem>>, vector<8x1xi32>
    %2 = tpu.iota {dimensions = array<i32: 1>} : vector<8x32xi32>
    %3 = vector.broadcast %1 : vector<8x1xi32> to vector<8x32xi32>
    %4 = arith.cmpi eq, %2, %3 : vector<8x32xi32>
    %cst = arith.constant dense<0xFF800000> : vector<8xf32>
    %5 = vector.multi_reduction <maximumf>, %0, %cst [1] : vector<8x32xf32> to vector<8xf32>
    %6 = vector.shape_cast %5 : vector<8xf32> to vector<8x1xf32>
    %7 = vector.broadcast %6 : vector<8x1xf32> to vector<8x32xf32>
    %8 = arith.subf %0, %7 : vector<8x32xf32>
    %cst_3 = arith.constant 0.000000e+00 : f32
    %9 = vector.broadcast %cst_3 : f32 to vector<8x32xf32>
    %10 = arith.select %4, %8, %9 : vector<8x32xi1>, vector<8x32xf32>
    %cst_4 = arith.constant dense<0.000000e+00> : vector<8xf32>
    %11 = vector.multi_reduction <add>, %10, %cst_4 [1] : vector<8x32xf32> to vector<8xf32>
    %12 = vector.shape_cast %11 : vector<8xf32> to vector<8x1xf32>
    %13 = math.exp %8 : vector<8x32xf32>
    %cst_5 = arith.constant dense<0.000000e+00> : vector<8xf32>
    %14 = vector.multi_reduction <add>, %13, %cst_5 [1] : vector<8x32xf32> to vector<8xf32>
    %15 = vector.shape_cast %14 : vector<8xf32> to vector<8x1xf32>
    %16 = math.log %15 : vector<8x1xf32>
    %17 = arith.subf %16, %12 : vector<8x1xf32>
    %cst_6 = arith.constant 0.000000e+00 : f32
    %18 = vector.broadcast %cst_6 : f32 to vector<8x1xf32>
    %19 = arith.subf %18, %17 : vector<8x1xf32>
    %20 = math.exp %19 : vector<8x1xf32>
    %cst_7 = arith.constant 1.000000e+00 : f32
    %21 = vector.broadcast %cst_7 : f32 to vector<8x1xf32>
    %22 = arith.subf %21, %20 : vector<8x1xf32>
    %cst_8 = arith.constant 0.000000e+00 : f32
    %23 = vector.broadcast %cst_8 : f32 to vector<8x1xf32>
    %24 = arith.maximumf %22, %23 : vector<8x1xf32>
    %25 = arith.mulf %24, %24 : vector<8x1xf32>
    %26 = arith.mulf %25, %17 : vector<8x1xf32>
    %c1_i32 = arith.constant 1 : i32
    %27 = arith.muli %arg0, %c1_i32 : i32
    %28 = arith.addi %27, %arg1 : i32
    %29 = tpu.iota {dimensions = array<i32: 0>} : vector<8x1xi32>
    %c8_i32 = arith.constant 8 : i32
    %30 = arith.muli %28, %c8_i32 : i32
    %31 = vector.broadcast %30 : i32 to vector<8x1xi32>
    %32 = arith.addi %31, %29 : vector<8x1xi32>
    %c8_i32_9 = arith.constant 8 : i32
    %33 = vector.broadcast %c8_i32_9 : i32 to vector<8x1xi32>
    %34 = arith.cmpi slt, %32, %33 : vector<8x1xi32>
    %cst_10 = arith.constant 0.000000e+00 : f32
    %35 = vector.broadcast %cst_10 : f32 to vector<8x1xf32>
    %36 = arith.select %34, %26, %35 : vector<8x1xi1>, vector<8x1xf32>
    %cst_11 = arith.constant dense<0.000000e+00> : vector<1xf32>
    %37 = vector.multi_reduction <add>, %36, %cst_11 [0] : vector<8x1xf32> to vector<1xf32>
    %38 = vector.shape_cast %37 : vector<1xf32> to vector<1x1xf32>
    %c0_i32 = arith.constant 0 : i32
    %39 = arith.cmpi eq, %arg1, %c0_i32 : i32
    %40 = arith.extui %39 : i1 to i32
    %c0_i32_12 = arith.constant 0 : i32
    %41 = arith.cmpi ne, %40, %c0_i32_12 : i32
    scf.if %41 {
      %cst_17 = arith.constant 0.000000e+00 : f32
      %45 = vector.broadcast %cst_17 : f32 to vector<1x1xf32>
      %c0_18 = arith.constant 0 : index
      %c0_19 = arith.constant 0 : index
      %46 = vector.load %arg4[%c0_18, %c0_19] : memref<1x1xf32, #tpu.memory_space<vmem>>, vector<1x1xf32>
      tpu.vector_store %arg4[%c0_18, %c0_19], %45 {strides = array<i32>} : memref<1x1xf32, #tpu.memory_space<vmem>>, vector<1x1xf32>,
    } else {
    }
    %c0_13 = arith.constant 0 : index
    %c0_14 = arith.constant 0 : index
    %42 = vector.load %arg4[%c0_13, %c0_14] : memref<1x1xf32, #tpu.memory_space<vmem>>, vector<1x1xf32>
    %43 = arith.addf %42, %38 : vector<1x1xf32>
    %c0_15 = arith.constant 0 : index
    %c0_16 = arith.constant 0 : index
    %44 = vector.load %arg4[%c0_15, %c0_16] : memref<1x1xf32, #tpu.memory_space<vmem>>, vector<1x1xf32>
    tpu.vector_store %arg4[%c0_15, %c0_16], %43 {strides = array<i32>} : memref<1x1xf32, #tpu.memory_space<vmem>>, vector<1x1xf32>,
    return
  }
  func.func @transform_0(%arg0: i32, %arg1: i32) -> (i32, i32) {
    %c1_i32 = arith.constant 1 : i32
    %0 = arith.muli %arg0, %c1_i32 : i32
    %1 = arith.addi %0, %arg1 : i32
    %c0_i32 = arith.constant 0 : i32
    %2 = arith.minsi %1, %c0_i32 : i32
    %c0_i32_0 = arith.constant 0 : i32
    %c0_i32_1 = arith.constant 0 : i32
    return %2, %c0_i32_0 : i32, i32
  }
  func.func @transform_1(%arg0: i32, %arg1: i32) -> (i32, i32) {
    %c1_i32 = arith.constant 1 : i32
    %0 = arith.muli %arg0, %c1_i32 : i32
    %1 = arith.addi %0, %arg1 : i32
    %c0_i32 = arith.constant 0 : i32
    %2 = arith.minsi %1, %c0_i32 : i32
    %c0_i32_0 = arith.constant 0 : i32
    %c0_i32_1 = arith.constant 0 : i32
    return %2, %c0_i32_0 : i32, i32
  }
  func.func @transform_2(%arg0: i32, %arg1: i32) -> (i32, i32) {
    %c0_i32 = arith.constant 0 : i32
    %c0_i32_0 = arith.constant 0 : i32
    return %arg0, %c0_i32 : i32, i32
  }
}

</mosaic_0001>

<llo_original>
// kernel: tpu_custom_call.1
$region0: #{tpu_custom_call.1}
  #allocation0 [shape = 'u32[]', space=smem, size = 0x4, offset = 0x4, fixed_abs, tag = 'smem constant byte address 0x4 - core index']
  #allocation1 [shape = 'u32[144,128]{1,0:T(1,128)}', space=vmem, size = 0x12000, scoped, tag = 'internal scratch']
  %s0 = inlined_call_operand.vmem [shape: f32[8,32], index: 0, kind: input, shape index: {}]
  %s1 = inlined_call_operand.vmem [shape: s32[8,1], index: 1, kind: input, shape index: {}]
  %s2 = inlined_call_operand.hbm [shape: f32[1,1], index: 2, kind: output, shape index: {}]
  %s3 = sld [smem:[#allocation0]]
  $region22: #{tpu_custom_call.1} parent=0
    _
  %s5 = ssub.s32 1, %s3
  %s6 = scalar_select 0, %s5, %s3
  $region1: #{tpu_custom_call.1} parent=0
    #allocation2 [shape = 'u8[512]{0}', space=vmem, size = 0x400, scoped, tag = 'output window, operand 0, single buffered']
    #allocation3 [shape = 's32[1]{0}', space=sflag, size = 0x4, scoped, tag = 'scoped memory for tpu_custom_call.1']
    %7 = vsyncpa [#allocation3], 0
    // Predicated region
    $region2: #{tpu_custom_call.1} parent=1 // pred_check
      _
    $region3: #{tpu_custom_call.1} parent=1 // pred_check_branch
      %9 = sbr.rel (0) target = $region5
    $region4: #{tpu_custom_call.1} parent=1 // pred_region
      %s10 = sadd.s32 0, 0
      %p11 = scmp.lt.s32.totalorder %s10, 0
      %s12 = scalar_select %p11, %s10, 0
      %p13 = scmp.lt.s32.totalorder %s12, 0
      %s14 = scalar_select %p13, %s12, 0
      %s15 = smul.addr %s14, 8
      %s16 = scalar_lea.vmem %s0, %s15
      %s17 = sadd.s32 0, 0
      %p18 = scmp.lt.s32.totalorder %s17, 0
      %s19 = scalar_select %p18, %s17, 0
    $region5: #{tpu_custom_call.1} parent=1 // pred_fallthru
      _
    // Predicated region
    $region6: #{tpu_custom_call.1} parent=1 // pred_check
      _
    $region7: #{tpu_custom_call.1} parent=1 // pred_check_branch
      %21 = sbr.rel (0) target = $region9
    $region8: #{tpu_custom_call.1} parent=1 // pred_region
      %s22 = sadd.s32 0, 0
      %p23 = scmp.lt.s32.totalorder %s22, 0
      %s24 = scalar_select %p23, %s22, 0
      %p25 = scmp.lt.s32.totalorder %s24, 0
      %s26 = scalar_select %p25, %s24, 0
      %s27 = smul.addr %s26, 8
      %s28 = scalar_lea.vmem %s1, %s27
      %s29 = sadd.s32 0, 0
      %p30 = scmp.lt.s32.totalorder %s29, 0
      %s31 = scalar_select %p30, %s29, 0
    $region9: #{tpu_custom_call.1} parent=1 // pred_fallthru
      _
    %s32 = sadd.s32 0, 0
    %p33 = scmp.lt.s32.totalorder %s32, 0
    %s34 = scalar_select %p33, %s32, 0
    %p35 = scmp.lt.s32.totalorder %s34, 0
    %s36 = scalar_select %p35, %s34, 0
    %s37 = smul.addr %s36, 8
    %s38 = scalar_lea.vmem %s0, %s37
    %s39 = sadd.s32 0, 0
    %p40 = scmp.lt.s32.totalorder %s39, 0
    %s41 = scalar_select %p40, %s39, 0
    %p42 = scmp.lt.s32.totalorder %s41, 0
    %s43 = scalar_select %p42, %s41, 0
    %s44 = smul.addr %s43, 8
    %s45 = scalar_lea.vmem %s1, %s44
    %s46 = sadd.s32 0, 0
    %p47 = scmp.lt.s32.totalorder %s46, 0
    %s48 = scalar_select %p47, %s46, 0
    %p49 = scmp.lt.s32.totalorder %s48, 0
    %s50 = scalar_select %p49, %s48, 0
    %s51 = smul.addr %s50, 8
    %s52 = scalar_lea.vmem %s0, %s51
    %s53 = sadd.s32 0, 0
    %p54 = scmp.lt.s32.totalorder %s53, 0
    %s55 = scalar_select %p54, %s53, 0
    %s56 = sadd.s32 0, 0
    %p57 = scmp.lt.s32.totalorder %s56, 0
    %s58 = scalar_select %p57, %s56, 0
    %p59 = scmp.lt.s32.totalorder %s58, 0
    %s60 = scalar_select %p59, %s58, 0
    %s61 = smul.addr %s60, 8
    %s62 = scalar_lea.vmem %s1, %s61
    %s63 = sadd.s32 0, 0
    %p64 = scmp.lt.s32.totalorder %s63, 0
    %s65 = scalar_select %p64, %s63, 0
    %v66 = vld [vmem:[%s52] sm:$0xff]
    %v67 = vld [vmem:[%s62] sm:$0xff]
    %v68 = vlaneseq
    %v69 = vand.u32 %v68, 127
    %70 = vset.pattern.permute.xlu0 0
    %71 = vperm.xlu0 %70, %v67
    %v72 = vpop.permute.xlu0 %71
    %vm73 = vcmp.eq.s32.totalorder %v69, %v72
    %vm74 = vcmask 261120
    %v75 = vsel %vm74, %v66, -inf
    %76 = vmax.xlane.f32.xlu0 %v75
    %v77 = vpop.xlane.xlu0 %76
    %v78 = vsub.f32 %v66, %v77
    %v79 = vsel %vm73, %v78, 0.0
    %v80 = vsel %vm74, %v79, 0.0
    %81 = vadd.xlane.f32.xlu0 %v80
    %v82 = vpop.xlane.xlu0 %81
    %v83 = vmul.f32 %v78, 1.442695
    %v84 = vpow.pop %v83
    %v85 = vsel %vm74, %v84, 0.0
    %86 = vadd.xlane.f32.xlu0 %v85
    %v87 = vpop.xlane.xlu0 %86
    %v88 = vlog2.pop %v87
    %v89 = vmul.f32 %v88, 0.6931472
    %v90 = vsub.f32 %v89, %v82
    %v91 = vsub.f32 0.0, %v90
    %v92 = vmul.f32 %v91, 1.442695
    %v93 = vpow.pop %v92
    %v94 = vsub.f32 1.0, %v93
    %v95 = vmax.f32 %v94, 0.0
    %v96 = vmul.f32 %v95, %v95
    %v97 = vmul.f32 %v96, %v90
    %s98 = sadd.s32 0, 0
    %v99 = vlaneseq
    %v100 = vshrl.u32 %v99, 7
    %s101 = smul.u32 %s98, 8
    %v102 = vstv %s101
    %v103 = vadd.s32 %v102, %v100
    %vm104 = vcmp.lt.s32.totalorder %v103, 8
    %v105 = vsel %vm104, %v97, 0.0
    %v106 = vrot.slane %v105, 4
    %v107 = vadd.f32 %v105, %v106
    %v108 = vrot.slane %v107, 2
    %v109 = vadd.f32 %v107, %v108
    %v110 = vrot.slane %v109, 1
    %v111 = vadd.f32 %v109, %v110
    %p112 = scmp.eq.s32.totalorder 0, 0
    // Predicated region
    $region10: #{tpu_custom_call.1} parent=1 // pred_check
      %p113 = pneg %p112
    $region11: #{tpu_custom_call.1} parent=1 // pred_check_branch
      %115 = sbr.rel (%p113) target = $region13
    $region12: #{tpu_custom_call.1} parent=1 // pred_region
      %vm116 = vcmask 0
      %117 = vst.msk [vmem:[#allocation2] sm:$0x1] %vm116, 0.0
    $region13: #{tpu_custom_call.1} parent=1 // pred_fallthru
      _
    %v118 = vld [vmem:[#allocation2] sm:$0x1]
    %v119 = vadd.f32 %v118, %v111
    %vm120 = vcmask 0
    %121 = vst.msk [vmem:[#allocation2] sm:$0x1] %vm120, %v119
    // Predicated region
    $region14: #{tpu_custom_call.1} parent=1 // pred_check
      _
    $region15: #{tpu_custom_call.1} parent=1 // pred_check_branch
      %123 = sbr.rel (0) target = $region17
    $region16: #{tpu_custom_call.1} parent=1 // pred_region
      %s125 = ssub.s32 16, 16
      %126 = vsyncadd [#allocation3], %s125
      %s128 = sshll.u32 [#allocation2], 4
      %s129 = int_to_ptr.vmem [resolvable:$true] %s128
      %131 = dma.vmem_to_hbm [thread:$0]  %s129, 16, %s2, [#allocation3]
    $region17: #{tpu_custom_call.1} parent=1 // pred_fallthru
      _
    // Predicated region
    $region18: #{tpu_custom_call.1} parent=1 // pred_check
      _
    $region19: #{tpu_custom_call.1} parent=1 // pred_check_branch
      %133 = sbr.rel (0) target = $region21
    $region20: #{tpu_custom_call.1} parent=1 // pred_region
      %134 = dma.done [#allocation3], 16
    $region21: #{tpu_custom_call.1} parent=1 // pred_fallthru
      _
    %135 = vsyncpa [#allocation3], 1

</llo_original>
